<compile_context>
chip_gen: v6e
topology: v6e:2x2x1
jax: 0.10.0
libtpu: 0.0.40
codegen_flags: <defaults>
</compile_context>

<pallas_src>
import functools

import jax
import jax.numpy as jnp
from jax.experimental import pallas as pl
from jax.experimental.pallas import tpu as pltpu


def _gap_sum_kernel(p_ref, o_ref, *, n_valid, tn, needs_mask):
    """Accumulate per-B-tile sums over the (folded) set axis.

    p_ref: (TB, TN, DL) input tile in VMEM
    o_ref: (TB, DL)     f32 output tile; resident across the N axis => it is
                        the accumulator (init at n == 0).
    """
    n = pl.program_id(1)

    @pl.when(n == 0)
    def _():
        o_ref[...] = jnp.zeros_like(o_ref)

    # f32 accumulation matches torch.mean numerics (and the native VPU path).
    x = p_ref[...].astype(jnp.float32)
    if needs_mask:
        # Zero padded / out-of-bounds rows of a ragged last N tile.
        row = n * tn + jax.lax.broadcasted_iota(jnp.int32, x.shape, 1)
        x = jnp.where(row < n_valid, x, 0.0)
    o_ref[...] += jnp.sum(x, axis=1)


def _pick_fold_k(N, D, cap=512):
    """Pick k (divisor of N) folding k set elements into the lane axis.

    Prefers k*D an exact multiple of 128 (fully dense lanes), else the best
    lane utilization; lane width is capped at `cap` to keep tiles small.
    """
    if D >= 128 or N <= 1:
        return 1
    best_k, best_score = 1, -1.0
    max_k = min(N, max(1, cap // D))
    for k in range(1, max_k + 1):
        if N % k:
            continue
        dl = k * D
        util = dl / (128.0 * ((dl + 127) // 128))
        score = (1.0 if dl % 128 == 0 else 0.0) + util + k * 1e-6
        if score > best_score:
            best_k, best_score = k, score
    return best_k


def gap_pooling(P, *, _max_tn=None):
    """Global average pooling over the set axis. P: (B, N, d_in) -> (B, d_in)."""
    B, N, D = P.shape
    out_dtype = P.dtype

    # ---- lane densification (free, layout-preserving reshape) ------------
    k = _pick_fold_k(N, D)
    N2 = N // k
    DL = k * D
    P2 = P.reshape(B, N2, DL)
    itemsize = P2.dtype.itemsize

    # ---- tile sizes -------------------------------------------------------
    budget = 2 * 1024 * 1024                 # bytes per pipelined input buffer
    set_bytes = N2 * DL * itemsize           # one full (folded) set

    # B tile: full B when small (satisfies the "equal full dim" rule for the
    # (TB, DL) output block); otherwise a multiple of 8, grown only while a
    # full set per element still fits the budget.
    if B <= 8:
        TB = B
    else:
        cap_tb = max(8, (budget // max(set_bytes, 1)) // 8 * 8)
        TB = B if B <= cap_tb else cap_tb

    # N tile: fill the remaining budget (multiple of 8, or the full extent).
    row_bytes = TB * DL * itemsize
    rows = max(8, (budget // max(row_bytes, 1)) // 8 * 8)
    TN = N2 if rows >= N2 else rows
    if _max_tn is not None:                  # test hook: force multi-step path
        TN = min(TN, max(8, (_max_tn // 8) * 8))
        if TN >= N2:
            TN = N2
    needs_mask = TN < N2 and (N2 % TN) != 0

    grid = (pl.cdiv(B, TB), pl.cdiv(N2, TN))

    kernel = functools.partial(
        _gap_sum_kernel, n_valid=N2, tn=TN, needs_mask=needs_mask)

    cost = pl.CostEstimate(
        flops=B * N * D,
        transcendentals=0,
        bytes_accessed=B * N * D * itemsize + B * DL * 4)

    sums = pl.pallas_call(
        kernel,
        out_shape=jax.ShapeDtypeStruct((B, DL), jnp.float32),
        grid=grid,
        in_specs=[pl.BlockSpec((TB, TN, DL), lambda b, n: (b, n, 0))],
        out_specs=pl.BlockSpec((TB, DL), lambda b, n: (b, 0)),
        compiler_params=pltpu.CompilerParams(
            dimension_semantics=("parallel", "arbitrary")),
        cost_estimate=cost,
    )(P2)

    # Fold the k lane sub-sums back and apply the true 1/N mean scale.
    U = sums.reshape(B, k, D).sum(axis=1) * (1.0 / N)
    return U.astype(out_dtype)


class PoolingPallas:
    """Mirrors the PyTorch Pooling module for pooling='GAP'."""

    def __init__(self, pooling, d_in=1, num_projections=1, num_ref_points=1,
                 tau_softsort=1):
        self.pooling = pooling
        if "GAP" in pooling:
            self.num_outputs = d_in
        else:
            raise ValueError("Pooling type {} not implemented!".format(pooling))

    def __call__(self, P):
        if self.pooling == "GAP":
            U = gap_pooling(P)
            violations = None
        else:
            raise ValueError(
                "Pooling type {} not implemented!".format(self.pooling))
        return (U, violations)


if __name__ == "__main__":
    key = jax.random.PRNGKey(0)

    # Primary shape consistent with the forward: B x N x d_in.
    B, N, d_in = 2, 8, 32
    P = jax.random.normal(key, (B, N, d_in), dtype=jnp.float32)

    module = PoolingPallas("GAP", d_in=d_in)
    U, violations = module(P)
    U = jax.block_until_ready(U)

    ref = jnp.mean(P, axis=1)
    assert U.shape == (B, d_in)
    assert violations is None
    assert jnp.allclose(U, ref, atol=1e-5, rtol=1e-5)

    # Extra shape coverage: multi-step masked reduction, lane folding,
    # partial densification (point-cloud d_in=3), and a no-exact-fold case.
    for (b2, n2, d2), max_tn in [
        ((2, 40, 128), 16),   # multi-step reduction with ragged masked tail
        ((3, 40, 32), None),  # lane-folded, single reduction step
        ((2, 100, 3), None),  # partial lane densification (D=3 point clouds)
        ((2, 9, 48), None),   # fold without exact 128-multiple lane width
    ]:
        key, sub = jax.random.split(key)
        P2 = jax.random.normal(sub, (b2, n2, d2), dtype=jnp.float32)
        U2 = jax.block_until_ready(gap_pooling(P2, _max_tn=max_tn))
        ref2 = jnp.mean(P2, axis=1)
        assert U2.shape == (b2, d2)
        assert jnp.allclose(U2, ref2, atol=1e-5, rtol=1e-5)

    # Low-precision input path (f32 accumulation inside the kernel).
    key, sub = jax.random.split(key)
    Pb = jax.random.normal(sub, (2, 64, 32), dtype=jnp.bfloat16)
    Ub = jax.block_until_ready(gap_pooling(Pb))
    refb = jnp.mean(Pb.astype(jnp.float32), axis=1).astype(jnp.bfloat16)
    assert jnp.allclose(Ub.astype(jnp.float32), refb.astype(jnp.float32),
                        atol=2e-2, rtol=2e-2)

    print("KERNEL_OK")
</pallas_src>

<mosaic_0001>
module attributes {stable_mosaic.version = 11 : i64} {
  func.func @_gap_sum_kernel(%arg0: i32, %arg1: i32, %arg2: memref<2x1x256xf32, #tpu.memory_space<vmem>>, %arg3: memref<2x256xf32, #tpu.memory_space<vmem>>) attributes {dimension_semantics = [#tpu.dimension_semantics<parallel>, #tpu.dimension_semantics<arbitrary>], iteration_bounds = array<i64: 1, 1>, scalar_prefetch = 0 : i64, scratch_operands = 0 : i64, tpu.core_type = #tpu.core_type<tc>, window_params = [{transform_indices = @transform_0, window_bounds = array<i64: 2, 1, 256>}, {transform_indices = @transform_1, window_bounds = array<i64: 2, 256>}]} {
    %c0_i32 = arith.constant 0 : i32
    %0 = arith.cmpi eq, %arg1, %c0_i32 : i32
    %1 = arith.extui %0 : i1 to i32
    %c0_i32_0 = arith.constant 0 : i32
    %2 = arith.cmpi ne, %1, %c0_i32_0 : i32
    scf.if %2 {
      %cst_7 = arith.constant 0.000000e+00 : f32
      %8 = vector.broadcast %cst_7 : f32 to vector<2x256xf32>
      %c0_8 = arith.constant 0 : index
      %c0_9 = arith.constant 0 : index
      %9 = vector.load %arg3[%c0_8, %c0_9] : memref<2x256xf32, #tpu.memory_space<vmem>>, vector<2x256xf32>
      tpu.vector_store %arg3[%c0_8, %c0_9], %8 {strides = array<i32>} : memref<2x256xf32, #tpu.memory_space<vmem>>, vector<2x256xf32>,
    } else {
    }
    %c0 = arith.constant 0 : index
    %c0_1 = arith.constant 0 : index
    %c0_2 = arith.constant 0 : index
    %3 = vector.load %arg2[%c0, %c0_1, %c0_2] : memref<2x1x256xf32, #tpu.memory_space<vmem>>, vector<2x1x256xf32>
    %c0_3 = arith.constant 0 : index
    %c0_4 = arith.constant 0 : index
    %4 = vector.load %arg3[%c0_3, %c0_4] : memref<2x256xf32, #tpu.memory_space<vmem>>, vector<2x256xf32>
    %cst = arith.constant dense<0.000000e+00> : vector<2x256xf32>
    %5 = vector.multi_reduction <add>, %3, %cst [1] : vector<2x1x256xf32> to vector<2x256xf32>
    %6 = arith.addf %4, %5 : vector<2x256xf32>
    %c0_5 = arith.constant 0 : index
    %c0_6 = arith.constant 0 : index
    %7 = vector.load %arg3[%c0_5, %c0_6] : memref<2x256xf32, #tpu.memory_space<vmem>>, vector<2x256xf32>
    tpu.vector_store %arg3[%c0_5, %c0_6], %6 {strides = array<i32>} : memref<2x256xf32, #tpu.memory_space<vmem>>, vector<2x256xf32>,
    return
  }
  func.func @transform_0(%arg0: i32, %arg1: i32) -> (i32, i32, i32) {
    %c0_i32 = arith.constant 0 : i32
    %c0_i32_0 = arith.constant 0 : i32
    return %arg0, %arg1, %c0_i32 : i32, i32, i32
  }
  func.func @transform_1(%arg0: i32, %arg1: i32) -> (i32, i32) {
    %c0_i32 = arith.constant 0 : i32
    %c0_i32_0 = arith.constant 0 : i32
    return %arg0, %c0_i32 : i32, i32
  }
}

</mosaic_0001>

<llo_original>
// kernel: tpu_custom_call.1
$region0: #{tpu_custom_call.1}
  #allocation0 [shape = 'u32[]', space=smem, size = 0x4, offset = 0x4, fixed_abs, tag = 'smem constant byte address 0x4 - core index']
  #allocation1 [shape = 'u32[144,128]{1,0:T(1,128)}', space=vmem, size = 0x12000, scoped, tag = 'internal scratch']
  %s0 = inlined_call_operand.hbm [shape: f32[2,1,256], index: 0, kind: input, shape index: {}]
  %s1 = inlined_call_operand.hbm [shape: f32[2,256], index: 1, kind: output, shape index: {}]
  %s2 = sld [smem:[#allocation0]]
  $region22: #{tpu_custom_call.1} parent=0
    _
  %s4 = ssub.s32 1, %s2
  %s5 = scalar_select 0, %s4, %s2
  $region1: #{tpu_custom_call.1} parent=0
    #allocation2 [shape = 'u8[2048]{0}', space=vmem, size = 0x800, scoped, tag = 'input window, operand 0, single buffered']
    #allocation3 [shape = 's32[1]{0}', space=sflag, size = 0x4, scoped, tag = 'scoped memory for tpu_custom_call.1']
    #allocation4 [shape = 's32[1]{0}', space=sflag, size = 0x4, scoped, tag = 'scoped memory for tpu_custom_call.1']
    #allocation5 [shape = 'u8[2048]{0}', space=vmem, size = 0x800, scoped, tag = 'output window, operand 0, single buffered']
    %6 = vsyncpa [#allocation3], 0
    %7 = vsyncpa [#allocation4], 0
    // Predicated region
    $region2: #{tpu_custom_call.1} parent=1 // pred_check
      _
    $region3: #{tpu_custom_call.1} parent=1 // pred_check_branch
      %9 = sbr.rel (0) target = $region5
    $region4: #{tpu_custom_call.1} parent=1 // pred_region
      %s11 = ssub.s32 64, 64
      %12 = vsyncadd [#allocation3], %s11
      %s13 = sshll.u32 [#allocation2], 4
      %s14 = int_to_ptr.vmem [resolvable:$true] %s13
      %19 = dma.hbm_to_vmem [thread:$0]  %s0, 64, %s14, [#allocation3], 32, 32, 2
    $region5: #{tpu_custom_call.1} parent=1 // pred_fallthru
      _
    // Predicated region
    $region6: #{tpu_custom_call.1} parent=1 // pred_check
      _
    $region7: #{tpu_custom_call.1} parent=1 // pred_check_branch
      %21 = sbr.rel (0) target = $region9
    $region8: #{tpu_custom_call.1} parent=1 // pred_region
      %22 = dma.done [#allocation3], 64
    $region9: #{tpu_custom_call.1} parent=1 // pred_fallthru
      _
    %p23 = scmp.eq.s32.totalorder 0, 0
    // Predicated region
    $region10: #{tpu_custom_call.1} parent=1 // pred_check
      %p24 = pneg %p23
    $region11: #{tpu_custom_call.1} parent=1 // pred_check_branch
      %26 = sbr.rel (%p24) target = $region13
    $region12: #{tpu_custom_call.1} parent=1 // pred_region
      %27 = vst [vmem:[#allocation5] sm:$0xf] 0.0
    $region13: #{tpu_custom_call.1} parent=1 // pred_fallthru
      _
    %v28 = vld [vmem:[#allocation2] sm:$0x3]
    %v29 = vld [vmem:[#allocation2 + $0x2] sm:$0x3]
    %v30 = vld [vmem:[#allocation5] sm:$0xf]
    %v31 = vadd.f32 %v28, 0.0
    %v32 = vadd.f32 %v29, 0.0
    %v35 = vcombine.low %v31, %v32
    %v37 = vunpack.c.l.s4 1935823168
    %v38 = vunpack.c.0.s8 %v37
    %v39 = vlaneseq
    %v40 = vshrl.u32 %v39, 7
    %v41 = vsub.s32 %v38, %v40
    %v42 = vrot.slane %v35, %v41
    %v44 = vadd.f32 %v30, %v42
    %45 = vst [vmem:[#allocation5] sm:$0xf] %v44
    // Predicated region
    $region14: #{tpu_custom_call.1} parent=1 // pred_check
      _
    $region15: #{tpu_custom_call.1} parent=1 // pred_check_branch
      %47 = sbr.rel (0) target = $region17
    $region16: #{tpu_custom_call.1} parent=1 // pred_region
      %s49 = ssub.s32 64, 64
      %50 = vsyncadd [#allocation4], %s49
      %s52 = sshll.u32 [#allocation5], 4
      %s53 = int_to_ptr.vmem [resolvable:$true] %s52
      %55 = dma.vmem_to_hbm [thread:$0]  %s53, 64, %s1, [#allocation4]
    $region17: #{tpu_custom_call.1} parent=1 // pred_fallthru
      _
    // Predicated region
    $region18: #{tpu_custom_call.1} parent=1 // pred_check
      _
    $region19: #{tpu_custom_call.1} parent=1 // pred_check_branch
      %57 = sbr.rel (0) target = $region21
    $region20: #{tpu_custom_call.1} parent=1 // pred_region
      %58 = dma.done [#allocation4], 64
    $region21: #{tpu_custom_call.1} parent=1 // pred_fallthru
      _
    %59 = vsyncpa [#allocation3], 1
    %60 = vsyncpa [#allocation4], 1

</llo_original>
